<compile_context>
chip_gen: v7x
topology: tpu7x:2x2x1
jax: 0.10.0
libtpu: 0.0.40
codegen_flags: <defaults>
</compile_context>

<pallas_src>
import functools

import jax
import jax.numpy as jnp
from jax.experimental import pallas as pl
from jax.experimental.pallas import tpu as pltpu


def _conv1d_bias_sigmoid_kernel(x_ref, w_ref, b_ref, o_ref, xp_ref, *,
                                K, L, C_in, C_out, pad_l, pad_r):
    """sigmoid(conv1d_same(x) + b) on one batch tile.

    x_ref  : VMEM (C_in,  NT, L)        unpadded input tile (channel-major)
    w_ref  : SMEM (C_out * C_in * K,)   flattened conv weights
    b_ref  : SMEM (C_out,)              bias
    o_ref  : VMEM (C_out, NT, L)        output tile
    xp_ref : VMEM (NT, L + K - 1)       scratch: zero-halo'd channel slab
    """
    nt = xp_ref.shape[0]

    # Fused ZeroSamePad1d: zero the halo columns.  Re-zeroed every grid step
    # (cheap: pad columns only) so correctness does not depend on how the
    # "parallel" batch axis is sharded across cores.
    if pad_l:
        xp_ref[:, :pad_l] = jnp.zeros((nt, pad_l), jnp.float32)
    if pad_r:
        xp_ref[:, pad_l + L:] = jnp.zeros((nt, pad_r), jnp.float32)

    accs = [None] * C_out
    for ic in range(C_in):
        # Copy this channel's rows into the interior of the padded slab.
        xp_ref[:, pad_l:pad_l + L] = x_ref[ic].astype(jnp.float32)
        # K shifted multiply-accumulates (K small & static -> unrolled, VPU).
        for k in range(K):
            tap = xp_ref[:, k:k + L]                   # (NT, L) shifted read
            for oc in range(C_out):
                w = w_ref[(oc * C_in + ic) * K + k]    # scalar from SMEM
                term = w * tap
                accs[oc] = term if accs[oc] is None else accs[oc] + term

    for oc in range(C_out):
        o_ref[oc, :, :] = jax.nn.sigmoid(accs[oc] + b_ref[oc]).astype(o_ref.dtype)


def _pick_batch_tile(N, C_in, C_out, L, itemsize):
    """Largest sublane-aligned batch tile whose (in + out) block stays ~<=4 MiB
    so that double-buffering plus in-kernel temporaries fit comfortably in the
    default scoped-VMEM budget on every TPU generation (v7x: 64 MiB physical)."""
    if N <= 8:
        return N                                      # full-extent block
    row_bytes = (C_in + C_out) * L * itemsize
    max_rows = max(8, (4 * 1024 * 1024) // row_bytes)
    n_tile = min(N, max_rows)
    return max(8, (n_tile // 8) * 8)                  # keep a multiple of 8


def denoising_logistic(x, weight, bias, interval_size, field, n_tile=None):
    """x: (N, C_in, interval_size); weight: (C_out, C_in, field); bias: (C_out,)."""
    N, C_in, L = x.shape
    C_out, C_in_w, K = weight.shape
    assert L == interval_size and C_in_w == C_in and K == field

    # ZeroSamePad1d (stride=1, dilation=1): total padding = field - 1,
    # left = total // 2, right = total - left (atacworks convention).
    pad_total = field - 1
    pad_l = pad_total // 2
    pad_r = pad_total - pad_l

    # Channel-major so kernel blocks are (C, N_tile, L): sublane/lane dense.
    # For the module default C_in == 1 this transpose is a free reshape.
    x_cm = jnp.transpose(x, (1, 0, 2))                # (C_in, N, L)

    if n_tile is None:
        n_tile = _pick_batch_tile(N, C_in, C_out, L, x.dtype.itemsize)
    num_blocks = pl.cdiv(N, n_tile)

    kernel = functools.partial(
        _conv1d_bias_sigmoid_kernel,
        K=K, L=L, C_in=C_in, C_out=C_out, pad_l=pad_l, pad_r=pad_r)

    cost = pl.CostEstimate(
        flops=2 * N * C_out * C_in * K * L,
        transcendentals=N * C_out * L,
        bytes_accessed=(x.size + N * C_out * L) * x.dtype.itemsize
                       + (weight.size + bias.size) * 4,
    )

    out_cm = pl.pallas_call(
        kernel,
        out_shape=jax.ShapeDtypeStruct((C_out, N, L), x.dtype),
        grid=(num_blocks,),
        in_specs=[
            pl.BlockSpec((C_in, n_tile, L), lambda n: (0, n, 0)),   # input tile
            pl.BlockSpec(memory_space=pltpu.MemorySpace.SMEM),      # weights
            pl.BlockSpec(memory_space=pltpu.MemorySpace.SMEM),      # bias
        ],
        out_specs=pl.BlockSpec((C_out, n_tile, L), lambda n: (0, n, 0)),
        scratch_shapes=[pltpu.VMEM((n_tile, L + pad_total), jnp.float32)],
        compiler_params=pltpu.CompilerParams(
            dimension_semantics=("parallel",)),     # shard batch tiles on v7x
        cost_estimate=cost,
    )(x_cm, weight.reshape(-1).astype(jnp.float32), bias.astype(jnp.float32))

    # torch .squeeze(1): drops the channel dim only when out_channels == 1.
    if C_out == 1:
        return out_cm[0]                              # (N, L)
    return jnp.transpose(out_cm, (1, 0, 2))           # (N, C_out, L)


def _reference(x, weight, bias, interval_size, field):
    """Pure-JAX reference of DenoisingLogistic.forward."""
    pad_total = field - 1
    pad_l = pad_total // 2
    pad_r = pad_total - pad_l
    xp = jnp.pad(x, ((0, 0), (0, 0), (pad_l, pad_r)))
    N, C_in, _ = x.shape
    C_out = weight.shape[0]
    L = interval_size
    out = jnp.zeros((N, C_out, L), jnp.float32) + bias[None, :, None]
    for oc in range(C_out):
        for ic in range(C_in):
            for k in range(field):
                out = out.at[:, oc, :].add(weight[oc, ic, k] * xp[:, ic, k:k + L])
    out = jax.nn.sigmoid(out)
    if C_out == 1:
        out = out[:, 0, :]
    return out


if __name__ == "__main__":
    N, C_in, C_out = 16, 1, 1
    interval_size, field = 256, 5

    key = jax.random.PRNGKey(0)
    kx, kw, kb = jax.random.split(key, 3)
    x = jax.random.normal(kx, (N, C_in, interval_size), dtype=jnp.float32)
    # Deterministic synthetic Conv1d parameters.
    weight = 0.1 * jax.random.normal(kw, (C_out, C_in, field), dtype=jnp.float32)
    bias = 0.1 * jax.random.normal(kb, (C_out,), dtype=jnp.float32)

    # n_tile=8 -> a 2-step batch grid even at this small demo size, so the
    # BlockSpec pipelining / index_map path is actually exercised.
    out = denoising_logistic(x, weight, bias, interval_size, field, n_tile=8)
    out = jax.block_until_ready(out)

    ref = _reference(x, weight, bias, interval_size, field)
    assert out.shape == (N, interval_size), out.shape
    assert jnp.allclose(out, ref, atol=1e-5, rtol=1e-5), \
        float(jnp.max(jnp.abs(out - ref)))

    print("KERNEL_OK")
</pallas_src>

<mosaic_0001>
module attributes {stable_mosaic.version = 11 : i64} {
  func.func @_conv1d_bias_sigmoid_kernel(%arg0: i32, %arg1: memref<1x8x256xf32, #tpu.memory_space<vmem>>, %arg2: memref<5xf32, #tpu.memory_space<smem>>, %arg3: memref<1xf32, #tpu.memory_space<smem>>, %arg4: memref<1x8x256xf32, #tpu.memory_space<vmem>>, %arg5: memref<8x260xf32, #tpu.memory_space<vmem>>) attributes {dimension_semantics = [#tpu.dimension_semantics<parallel>], iteration_bounds = array<i64: 2>, scalar_prefetch = 0 : i64, scratch_operands = 1 : i64, tpu.core_type = #tpu.core_type<tc>, window_params = [{transform_indices = @transform_0, window_bounds = array<i64: 1, 8, 256>}, {transform_indices = @transform_1, window_bounds = array<i64: 5>}, {transform_indices = @transform_2, window_bounds = array<i64: 1>}, {transform_indices = @transform_3, window_bounds = array<i64: 1, 8, 256>}]} {
    %cst = arith.constant 0.000000e+00 : f32
    %0 = vector.broadcast %cst : f32 to vector<8x2xf32>
    %c0 = arith.constant 0 : index
    %c0_0 = arith.constant 0 : index
    %1 = vector.load %arg5[%c0, %c0_0] : memref<8x260xf32, #tpu.memory_space<vmem>>, vector<8x2xf32>
    tpu.vector_store %arg5[%c0, %c0_0], %0 {strides = array<i32>} : memref<8x260xf32, #tpu.memory_space<vmem>>, vector<8x2xf32>,
    %cst_1 = arith.constant 0.000000e+00 : f32
    %2 = vector.broadcast %cst_1 : f32 to vector<8x2xf32>
    %c0_2 = arith.constant 0 : index
    %c258 = arith.constant 258 : index
    %3 = vector.load %arg5[%c0_2, %c258] : memref<8x260xf32, #tpu.memory_space<vmem>>, vector<8x2xf32>
    tpu.vector_store %arg5[%c0_2, %c258], %2 {strides = array<i32>} : memref<8x260xf32, #tpu.memory_space<vmem>>, vector<8x2xf32>,
    %c0_3 = arith.constant 0 : index
    %c0_4 = arith.constant 0 : index
    %c0_5 = arith.constant 0 : index
    %4 = vector.load %arg1[%c0_3, %c0_4, %c0_5] : memref<1x8x256xf32, #tpu.memory_space<vmem>>, vector<1x8x256xf32>
    %5 = vector.shape_cast %4 : vector<1x8x256xf32> to vector<8x256xf32>
    %c0_6 = arith.constant 0 : index
    %c2 = arith.constant 2 : index
    %6 = vector.load %arg5[%c0_6, %c2] : memref<8x260xf32, #tpu.memory_space<vmem>>, vector<8x256xf32>
    tpu.vector_store %arg5[%c0_6, %c2], %5 {strides = array<i32>} : memref<8x260xf32, #tpu.memory_space<vmem>>, vector<8x256xf32>,
    %c0_7 = arith.constant 0 : index
    %c0_8 = arith.constant 0 : index
    %7 = vector.load %arg5[%c0_7, %c0_8] : memref<8x260xf32, #tpu.memory_space<vmem>>, vector<8x256xf32>
    %c0_9 = arith.constant 0 : index
    %8 = memref.load %arg2[%c0_9] : memref<5xf32, #tpu.memory_space<smem>>
    %9 = vector.broadcast %8 : f32 to vector<8x256xf32>
    %10 = arith.mulf %9, %7 : vector<8x256xf32>
    %c0_10 = arith.constant 0 : index
    %c1 = arith.constant 1 : index
    %11 = vector.load %arg5[%c0_10, %c1] : memref<8x260xf32, #tpu.memory_space<vmem>>, vector<8x256xf32>
    %c1_11 = arith.constant 1 : index
    %12 = memref.load %arg2[%c1_11] : memref<5xf32, #tpu.memory_space<smem>>
    %13 = vector.broadcast %12 : f32 to vector<8x256xf32>
    %14 = arith.mulf %13, %11 : vector<8x256xf32>
    %15 = arith.addf %10, %14 : vector<8x256xf32>
    %c0_12 = arith.constant 0 : index
    %c2_13 = arith.constant 2 : index
    %16 = vector.load %arg5[%c0_12, %c2_13] : memref<8x260xf32, #tpu.memory_space<vmem>>, vector<8x256xf32>
    %c2_14 = arith.constant 2 : index
    %17 = memref.load %arg2[%c2_14] : memref<5xf32, #tpu.memory_space<smem>>
    %18 = vector.broadcast %17 : f32 to vector<8x256xf32>
    %19 = arith.mulf %18, %16 : vector<8x256xf32>
    %20 = arith.addf %15, %19 : vector<8x256xf32>
    %c0_15 = arith.constant 0 : index
    %c3 = arith.constant 3 : index
    %21 = vector.load %arg5[%c0_15, %c3] : memref<8x260xf32, #tpu.memory_space<vmem>>, vector<8x256xf32>
    %c3_16 = arith.constant 3 : index
    %22 = memref.load %arg2[%c3_16] : memref<5xf32, #tpu.memory_space<smem>>
    %23 = vector.broadcast %22 : f32 to vector<8x256xf32>
    %24 = arith.mulf %23, %21 : vector<8x256xf32>
    %25 = arith.addf %20, %24 : vector<8x256xf32>
    %c0_17 = arith.constant 0 : index
    %c4 = arith.constant 4 : index
    %26 = vector.load %arg5[%c0_17, %c4] : memref<8x260xf32, #tpu.memory_space<vmem>>, vector<8x256xf32>
    %c4_18 = arith.constant 4 : index
    %27 = memref.load %arg2[%c4_18] : memref<5xf32, #tpu.memory_space<smem>>
    %28 = vector.broadcast %27 : f32 to vector<8x256xf32>
    %29 = arith.mulf %28, %26 : vector<8x256xf32>
    %30 = arith.addf %25, %29 : vector<8x256xf32>
    %c0_19 = arith.constant 0 : index
    %31 = memref.load %arg3[%c0_19] : memref<1xf32, #tpu.memory_space<smem>>
    %32 = vector.broadcast %31 : f32 to vector<8x256xf32>
    %33 = arith.addf %30, %32 : vector<8x256xf32>
    %34 = arith.negf %33 : vector<8x256xf32>
    %35 = math.exp %34 : vector<8x256xf32>
    %cst_20 = arith.constant 1.000000e+00 : f32
    %36 = vector.broadcast %cst_20 : f32 to vector<8x256xf32>
    %37 = arith.addf %36, %35 : vector<8x256xf32>
    %38 = arith.divf %36, %37 : vector<8x256xf32>
    %c0_21 = arith.constant 0 : index
    %c0_22 = arith.constant 0 : index
    %c0_23 = arith.constant 0 : index
    %39 = vector.load %arg4[%c0_21, %c0_22, %c0_23] : memref<1x8x256xf32, #tpu.memory_space<vmem>>, vector<1x8x256xf32>
    %40 = vector.shape_cast %39 : vector<1x8x256xf32> to vector<8x256xf32>
    %41 = vector.shape_cast %38 : vector<8x256xf32> to vector<1x8x256xf32>
    tpu.vector_store %arg4[%c0_21, %c0_22, %c0_23], %41 {strides = array<i32>} : memref<1x8x256xf32, #tpu.memory_space<vmem>>, vector<1x8x256xf32>,
    return
  }
  func.func @transform_0(%arg0: i32) -> (i32, i32, i32) {
    %c0_i32 = arith.constant 0 : i32
    %c0_i32_0 = arith.constant 0 : i32
    %c0_i32_1 = arith.constant 0 : i32
    return %c0_i32, %arg0, %c0_i32_0 : i32, i32, i32
  }
  func.func @transform_1(%arg0: i32) -> i32 {
    %c0_i32 = arith.constant 0 : i32
    %c0_i32_0 = arith.constant 0 : i32
    return %c0_i32 : i32
  }
  func.func @transform_2(%arg0: i32) -> i32 {
    %c0_i32 = arith.constant 0 : i32
    %c0_i32_0 = arith.constant 0 : i32
    return %c0_i32 : i32
  }
  func.func @transform_3(%arg0: i32) -> (i32, i32, i32) {
    %c0_i32 = arith.constant 0 : i32
    %c0_i32_0 = arith.constant 0 : i32
    %c0_i32_1 = arith.constant 0 : i32
    return %c0_i32, %arg0, %c0_i32_0 : i32, i32, i32
  }
}

</mosaic_0001>

<llo_original>
// kernel: tpu_custom_call.1
$region0: #{tpu_custom_call.1}
  #allocation0 [shape = 'u32[]', space=smem, size = 0x4, offset = 0x4, fixed_abs, tag = 'smem constant byte address 0x4 - core index']
  #allocation1 [shape = 'u32[144,128]{1,0:T(1,128)}', space=vmem, size = 0x12000, scoped, tag = 'internal scratch']
  #allocation2 [shape = 'f32[8,260]{1,0:T(8,128)}', space=vmem, size = 0x3000, scoped, tag = 'scratch operand']
  #allocation3 [shape = 'f32[1]{0:T(128)S(6)}', space=smem, size = 0x200, scoped, tag = 'scoped memory for tpu_custom_call.1']
  %s0 = inlined_call_operand.hbm [shape: f32[1,16,256], index: 0, kind: input, shape index: {}]
  %s1 = inlined_call_operand.vmem [shape: f32[5], index: 1, kind: input, shape index: {}]
  %s2 = inlined_call_operand.<no memory space> [shape: f32[1], index: 2, kind: input, shape index: {}]
  %s3 = inlined_call_operand.hbm [shape: f32[1,16,256], index: 3, kind: output, shape index: {}]
  %s4 = sld [smem:[#allocation0]]
  $region53: #{tpu_custom_call.1} parent=0
    _
  %s6 = ssub.s32 1, %s4
  %s7 = scalar_select 0, %s6, %s4
  %8 = sst [smem:[#allocation3]] %s2
  $region1: #{tpu_custom_call.1} parent=0
    #allocation4 [shape = 'u8[16384]{0}', space=vmem, size = 0x4000, scoped, tag = 'input window, operand 0']
    #allocation5 [shape = 's32[2]{0}', space=sflag, size = 0x8, scoped, tag = 'scoped memory for tpu_custom_call.1']
    #allocation6 [shape = 's32[2]{0}', space=sflag, size = 0x8, scoped, tag = 'scoped memory for tpu_custom_call.1']
    #allocation7 [shape = 's32[2]{0}', space=sflag, size = 0x8, scoped, tag = 'scoped memory for tpu_custom_call.1']
    #allocation8 [shape = 'u8[512]{0}', space=smem, size = 0x200, scoped, tag = 'input window, operand 1, single buffered']
    #allocation9 [shape = 'u8[16384]{0}', space=vmem, size = 0x4000, scoped, tag = 'output window, operand 0']
    %9 = vsyncpa [#allocation5], 0
    %s10 = scalar_lea.sflag [#allocation5], 1
    %11 = vsyncpa %s10, 0
    %12 = vsyncpa [#allocation7], 0
    %13 = vsyncpa [#allocation6], 0
    %s14 = scalar_lea.sflag [#allocation6], 1
    %15 = vsyncpa %s14, 0
    loop: start=0, step=1, limit=4
    $region2: #{tpu_custom_call.1} parent=1 // loop_pre_header
      _
    $region3: #{tpu_custom_call.1} parent=1 // loop_header
      %s17 = sphi 0, %s21
      %p18 = scmp.ge.s32.totalorder %s17, 4
      %s27 = sphi 0, %s29
      %s30 = sphi 0, %s27
      %s31 = sphi 0, %s30
      %s47 = sphi 0, %s31
      %s51 = sphi 0, %s51
      %s53 = sphi 0, %s51
      %s54 = sphi 0, %s53
      %s68 = sphi 0, %s54
      %s72 = sphi 0, %s72
      %s74 = sphi 0, %s72
      %s75 = sphi 0, %s74
      %s89 = sphi 0, %s75
      %s95 = sphi 0, %s97
      %s98 = sphi 0, %s95
      %s99 = sphi 0, %s98
      %s115 = sphi 0, %s99
    $region4: #{tpu_custom_call.1} parent=1 // loop_header_branch
      %20 = sbr.rel (%p18) target = $region8
    $region5: #{tpu_custom_call.1} parent=1 // loop_body
      %s22 = ssub.s32 %s17, 1
      %s23 = ssub.s32 %s17, 2
      %s24 = sadd.s32 %s17, 1
      %s25 = ssub.s32 %s17, %s24
      %p26 = scmp.eq.s32.totalorder %s25, 0
      %s28 = sadd.s32 %s27, 1
      %s29 = scalar_select %p26, %s27, %s28
      %p32 = pneg %p26
      %p33 = scmp.eq.s32.totalorder %s17, 1
      %p34 = por %p32, %p33
      %p35 = scmp.ne.s32.totalorder %s27, %s30
      %p36 = scmp.eq.s32.totalorder %s17, 0
      %p37 = por %p35, %p36
      %p38 = scmp.ne.s32.totalorder %s27, %s30
      %p39 = scmp.eq.s32.totalorder %s22, 1
      %p40 = por %p38, %p39
      %p41 = scmp.ne.s32.totalorder %s30, %s31
      %p42 = scmp.eq.s32.totalorder %s22, 0
      %p43 = por %p41, %p42
      %p44 = scmp.ne.s32.totalorder %s30, %s31
      %p45 = scmp.eq.s32.totalorder %s23, 1
      %p46 = por %p44, %p45
      %p48 = scmp.ne.s32.totalorder %s31, %s47
      %p49 = scmp.eq.s32.totalorder %s23, 0
      %p50 = por %p48, %p49
      %s52 = sadd.s32 %s51, 1
      %p55 = scmp.eq.s32.totalorder %s17, 1
      %p56 = scmp.ne.s32.totalorder %s51, %s53
      %p57 = scmp.eq.s32.totalorder %s17, 0
      %p58 = por %p56, %p57
      %p59 = scmp.ne.s32.totalorder %s51, %s53
      %p60 = scmp.eq.s32.totalorder %s22, 1
      %p61 = por %p59, %p60
      %p62 = scmp.ne.s32.totalorder %s53, %s54
      %p63 = scmp.eq.s32.totalorder %s22, 0
      %p64 = por %p62, %p63
      %p65 = scmp.ne.s32.totalorder %s53, %s54
      %p66 = scmp.eq.s32.totalorder %s23, 1
      %p67 = por %p65, %p66
      %p69 = scmp.ne.s32.totalorder %s54, %s68
      %p70 = scmp.eq.s32.totalorder %s23, 0
      %p71 = por %p69, %p70
      %s73 = sadd.s32 %s72, 1
      %p76 = scmp.eq.s32.totalorder %s17, 1
      %p77 = scmp.ne.s32.totalorder %s72, %s74
      %p78 = scmp.eq.s32.totalorder %s17, 0
      %p79 = por %p77, %p78
      %p80 = scmp.ne.s32.totalorder %s72, %s74
      %p81 = scmp.eq.s32.totalorder %s22, 1
      %p82 = por %p80, %p81
      %p83 = scmp.ne.s32.totalorder %s74, %s75
      %p84 = scmp.eq.s32.totalorder %s22, 0
      %p85 = por %p83, %p84
      %p86 = scmp.ne.s32.totalorder %s74, %s75
      %p87 = scmp.eq.s32.totalorder %s23, 1
      %p88 = por %p86, %p87
      %p90 = scmp.ne.s32.totalorder %s75, %s89
      %p91 = scmp.eq.s32.totalorder %s23, 0
      %p92 = por %p90, %p91
      %s93 = ssub.s32 %s17, %s24
      %p94 = scmp.eq.s32.totalorder %s93, 0
      %s96 = sadd.s32 %s95, 1
      %s97 = scalar_select %p94, %s95, %s96
      %p100 = pneg %p94
      %p101 = scmp.eq.s32.totalorder %s17, 1
      %p102 = por %p100, %p101
      %p103 = scmp.ne.s32.totalorder %s95, %s98
      %p104 = scmp.eq.s32.totalorder %s17, 0
      %p105 = por %p103, %p104
      %p106 = scmp.ne.s32.totalorder %s95, %s98
      %p107 = scmp.eq.s32.totalorder %s22, 1
      %p108 = por %p106, %p107
      %p109 = scmp.ne.s32.totalorder %s98, %s99
      %p110 = scmp.eq.s32.totalorder %s22, 0
      %p111 = por %p109, %p110
      %p112 = scmp.ne.s32.totalorder %s98, %s99
      %p113 = scmp.eq.s32.totalorder %s23, 1
      %p114 = por %p112, %p113
      %p116 = scmp.ne.s32.totalorder %s99, %s115
      %p117 = scmp.eq.s32.totalorder %s23, 0
      %p118 = por %p116, %p117
      %p119 = scmp.le.s32.totalorder 1, %s17
      %p120 = scmp.lt.s32.totalorder %s17, 3
      %p121 = pnand %p119, %p120
      %p122 = pneg %p121
      // Predicated region
      $region9: #{tpu_custom_call.1} parent=5 // pred_check
        _
      $region10: #{tpu_custom_call.1} parent=5 // pred_check_branch
        %124 = sbr.rel (%p121) target = $region12
      $region11: #{tpu_custom_call.1} parent=5 // pred_region
        %s125 = ssub.s32 %s17, 1
        // Predicated region
        $region13: #{tpu_custom_call.1} parent=11 // pred_check
          %p126 = pneg %p64
        $region14: #{tpu_custom_call.1} parent=11 // pred_check_branch
          %128 = sbr.rel (%p126) target = $region16
        $region15: #{tpu_custom_call.1} parent=11 // pred_region
          %s130 = ssub.s32 16, 16
          %131 = vsyncadd [#allocation7], %s130
          %s133 = sshll.u32 %s1, 4
          %s134 = int_to_ptr.vmem [resolvable:$true] %s133
          %136 = dma.vmem_to_smem %s134, 16, [#allocation8], [#allocation7]
        $region16: #{tpu_custom_call.1} parent=11 // pred_fallthru
          _
        // Predicated region
        $region17: #{tpu_custom_call.1} parent=11 // pred_check
          %p137 = pneg %p85
        $region18: #{tpu_custom_call.1} parent=11 // pred_check_branch
          %139 = sbr.rel (%p137) target = $region20
        $region19: #{tpu_custom_call.1} parent=11 // pred_region
          _
        $region20: #{tpu_custom_call.1} parent=11 // pred_fallthru
          _
      $region12: #{tpu_custom_call.1} parent=5 // pred_fallthru
        _
      %p140 = scmp.lt.s32.totalorder %s17, 2
      // Predicated region
      $region21: #{tpu_custom_call.1} parent=5 // pred_check
        %p141 = pneg %p140
      $region22: #{tpu_custom_call.1} parent=5 // pred_check_branch
        %143 = sbr.rel (%p141) target = $region24
      $region23: #{tpu_custom_call.1} parent=5 // pred_region
        // Predicated region
        $region25: #{tpu_custom_call.1} parent=23 // pred_check
          %p144 = pneg %p37
        $region26: #{tpu_custom_call.1} parent=23 // pred_check_branch
          %146 = sbr.rel (%p144) target = $region28
        $region27: #{tpu_custom_call.1} parent=23 // pred_region
          %s147 = sand.u32 %s27, 1
          %s148 = scalar_lea.sflag [#allocation5], %s147
          %s149 = sand.u32 %s27, 1
          %s150 = smul.addr %s149, 16
          %s151 = scalar_lea.vmem [#allocation4], %s150
          %s153 = ssub.s32 256, 256
          %154 = vsyncadd %s148, %s153
          %s155 = smul.addr %s17, 2
          %s156 = smul.addr %s155, 128
          %s157 = scalar_lea.hbm %s0, %s156
          %s159 = sshll.u32 %s151, 4
          %s160 = int_to_ptr.vmem [resolvable:$true] %s159
          %162 = dma.hbm_to_vmem [thread:$0]  %s157, 256, %s160, %s148
        $region28: #{tpu_custom_call.1} parent=23 // pred_fallthru
          _
      $region24: #{tpu_custom_call.1} parent=5 // pred_fallthru
        _
      %p163 = scmp.le.s32.totalorder 1, %s17
      %p164 = scmp.lt.s32.totalorder %s17, 3
      %p165 = pnand %p163, %p164
      %p166 = pneg %p165
      // Predicated region
      $region29: #{tpu_custom_call.1} parent=5 // pred_check
        _
      $region30: #{tpu_custom_call.1} parent=5 // pred_check_branch
        %168 = sbr.rel (%p165) target = $region32
      $region31: #{tpu_custom_call.1} parent=5 // pred_region
        %s169 = ssub.s32 %s17, 1
        %s170 = sand.u32 %s30, 1
        %s171 = scalar_lea.sflag [#allocation5], %s170
        %s172 = sand.u32 %s30, 1
        %s173 = smul.addr %s172, 16
        %s174 = scalar_lea.vmem [#allocation4], %s173
        // Predicated region
        $region33: #{tpu_custom_call.1} parent=31 // pred_check
          %p175 = pneg %p43
        $region34: #{tpu_custom_call.1} parent=31 // pred_check_branch
          %177 = sbr.rel (%p175) target = $region36
        $region35: #{tpu_custom_call.1} parent=31 // pred_region
          %178 = dma.done %s171, 256
        $region36: #{tpu_custom_call.1} parent=31 // pred_fallthru
          _
        // Predicated region
        $region37: #{tpu_custom_call.1} parent=31 // pred_check
          %p179 = pneg %p64
        $region38: #{tpu_custom_call.1} parent=31 // pred_check_branch
          %181 = sbr.rel (%p179) target = $region40
        $region39: #{tpu_custom_call.1} parent=31 // pred_region
          %182 = dma.done [#allocation7], 16
        $region40: #{tpu_custom_call.1} parent=31 // pred_fallthru
          _
        %183 = sfence
        %s184 = sand.u32 %s30, 1
        %s185 = scalar_lea.sflag [#allocation5], %s184
        %s186 = sand.u32 %s30, 1
        %s187 = smul.addr %s186, 16
        %s188 = scalar_lea.vmem [#allocation4], %s187
        %p189 = pneg %p43
        %p190 = pneg %p40
        %p191 = pneg %p64
        %p192 = pneg %p61
        %p193 = pneg %p85
        %p194 = pneg %p82
        %p195 = pneg %p111
        %p196 = pneg %p108
        %s197 = sand.u32 %s98, 1
        %s198 = scalar_lea.sflag [#allocation6], %s197
        %s199 = sand.u32 %s98, 1
        %s200 = smul.addr %s199, 16
        %s201 = scalar_lea.vmem [#allocation9], %s200
        %vm202 = vcmask 15360
        %203 = vst.msk [vmem:[#allocation2] sm:$0xff] %vm202, 0.0
        %vm204 = vcmask 31760
        %205 = vst.msk [vmem:[#allocation2 + $0x10] sm:$0xff] %vm204, 0.0
        %v206 = vld [vmem:[%s174] sm:$0xff]
        %v207 = vld [vmem:[%s174 + $0x8] sm:$0xff]
        %210 = vrot.lane.b32.xlu0 %v206, 2
        %v211 = vpop.permute.xlu0 %210
        %212 = vrot.lane.b32.xlu0 %v207, 2
        %v213 = vpop.permute.xlu0 %212
        %v214 = vsel %vm202, %v211, %v213
        %vm218 = vcmask 1047568
        %219 = vst.msk [vmem:[#allocation2] sm:$0xff] %vm218, %v211
        %220 = vst [vmem:[#allocation2 + $0x8] sm:$0xff] %v214
        %221 = vst.msk [vmem:[#allocation2 + $0x10] sm:$0xff] %vm202, %v213
        %v222 = vld [vmem:[#allocation2] sm:$0xff]
        %v223 = vld [vmem:[#allocation2 + $0x8] sm:$0xff]
        %s224 = sld [smem:[#allocation8]]
        %v225 = vstv %s224
        %v226 = vmul.f32 %v225, %v222
        %v227 = vmul.f32 %v225, %v223
        %v228 = vld [vmem:[#allocation2] sm:$0xff]
        %v229 = vld [vmem:[#allocation2 + $0x8] sm:$0xff]
        %v230 = vld [vmem:[#allocation2 + $0x10] sm:$0xff]
        %s231 = sld [smem:[#allocation8 + $0x1]]
        %v232 = vstv %s231
        %v233 = vmul.f32 %v232, %v228
        %v234 = vmul.f32 %v232, %v229
        %v235 = vmul.f32 %v232, %v230
        %239 = vrot.lane.b32.xlu0 %v233, 127
        %v240 = vpop.permute.xlu0 %239
        %241 = vrot.lane.b32.xlu0 %v234, 127
        %v242 = vpop.permute.xlu0 %241
        %243 = vrot.lane.b32.xlu0 %v235, 127
        %v244 = vpop.permute.xlu0 %243
        %vm245 = vcmask 1039360
        %v246 = vsel %vm245, %v240, %v242
        %v247 = vsel %vm245, %v242, %v244
        %v250 = vadd.f32 %v226, %v246
        %v251 = vadd.f32 %v227, %v247
        %s252 = sld [smem:[#allocation8 + $0x2]]
        %v253 = vstv %s252
        %v254 = vmul.f32 %v253, %v228
        %v255 = vmul.f32 %v253, %v229
        %v256 = vmul.f32 %v253, %v230
        %260 = vrot.lane.b32.xlu0 %v254, 126
        %v261 = vpop.permute.xlu0 %260
        %262 = vrot.lane.b32.xlu0 %v255, 126
        %v263 = vpop.permute.xlu0 %262
        %264 = vrot.lane.b32.xlu0 %v256, 126
        %v265 = vpop.permute.xlu0 %264
        %vm266 = vcmask 1031168
        %v267 = vsel %vm266, %v261, %v263
        %v268 = vsel %vm266, %v263, %v265
        %v271 = vadd.f32 %v250, %v267
        %v272 = vadd.f32 %v251, %v268
        %s273 = sld [smem:[#allocation8 + $0x3]]
        %v274 = vstv %s273
        %v275 = vmul.f32 %v274, %v228
        %v276 = vmul.f32 %v274, %v229
        %v277 = vmul.f32 %v274, %v230
        %281 = vrot.lane.b32.xlu0 %v275, 125
        %v282 = vpop.permute.xlu0 %281
        %283 = vrot.lane.b32.xlu0 %v276, 125
        %v284 = vpop.permute.xlu0 %283
        %285 = vrot.lane.b32.xlu0 %v277, 125
        %v286 = vpop.permute.xlu0 %285
        %vm287 = vcmask 1022976
        %v288 = vsel %vm287, %v282, %v284
        %v289 = vsel %vm287, %v284, %v286
        %v292 = vadd.f32 %v271, %v288
        %v293 = vadd.f32 %v272, %v289
        %s294 = sld [smem:[#allocation8 + $0x4]]
        %v295 = vstv %s294
        %v296 = vmul.f32 %v295, %v228
        %v297 = vmul.f32 %v295, %v229
        %v298 = vmul.f32 %v295, %v230
        %302 = vrot.lane.b32.xlu0 %v296, 124
        %v303 = vpop.permute.xlu0 %302
        %304 = vrot.lane.b32.xlu0 %v297, 124
        %v305 = vpop.permute.xlu0 %304
        %306 = vrot.lane.b32.xlu0 %v298, 124
        %v307 = vpop.permute.xlu0 %306
        %vm308 = vcmask 1014784
        %v309 = vsel %vm308, %v303, %v305
        %v310 = vsel %vm308, %v305, %v307
        %v313 = vadd.f32 %v292, %v309
        %v314 = vadd.f32 %v293, %v310
        %s315 = sld [smem:[#allocation3]]
        %v316 = vstv %s315
        %v317 = vadd.f32 %v313, %v316
        %v318 = vadd.f32 %v314, %v316
        %v319 = vxor.u32 %v317, 2147483648
        %v320 = vxor.u32 %v318, 2147483648
        %v321 = vmul.f32 %v319, 1.442695
        %v322 = vpow.pop %v321
        %v323 = vmul.f32 %v320, 1.442695
        %v324 = vpow.pop %v323
        %v325 = vadd.f32 %v322, 1.0
        %v326 = vadd.f32 %v324, 1.0
        %v327 = vrcp.pop %v325
        %v328 = vmul.f32 1.0, %v327
        %v329 = vrcp.pop %v326
        %v330 = vmul.f32 1.0, %v329
        %331 = vst [vmem:[%s201] sm:$0xff] %v328
        %332 = vst [vmem:[%s201 + $0x8] sm:$0xff] %v330
        %s333 = sand.u32 %s98, 1
        %s334 = scalar_lea.sflag [#allocation6], %s333
        %s335 = sand.u32 %s98, 1
        %s336 = smul.addr %s335, 16
        %s337 = scalar_lea.vmem [#allocation9], %s336
        // Predicated region
        $region41: #{tpu_custom_call.1} parent=31 // pred_check
          %p338 = pneg %p108
        $region42: #{tpu_custom_call.1} parent=31 // pred_check_branch
          %340 = sbr.rel (%p338) target = $region44
        $region43: #{tpu_custom_call.1} parent=31 // pred_region
          %s342 = ssub.s32 256, 256
          %343 = vsyncadd %s334, %s342
          %s344 = smul.addr %s22, 2
          %s345 = smul.addr %s344, 128
          %s346 = scalar_lea.hbm %s3, %s345
          %s348 = sshll.u32 %s337, 4
          %s349 = int_to_ptr.vmem [resolvable:$true] %s348
          %351 = dma.vmem_to_hbm [thread:$0]  %s349, 256, %s346, %s334
        $region44: #{tpu_custom_call.1} parent=31 // pred_fallthru
          _
      $region32: #{tpu_custom_call.1} parent=5 // pred_fallthru
        _
      %p352 = scmp.le.s32.totalorder 2, %s17
      // Predicated region
      $region45: #{tpu_custom_call.1} parent=5 // pred_check
        %p353 = pneg %p352
      $region46: #{tpu_custom_call.1} parent=5 // pred_check_branch
        %355 = sbr.rel (%p353) target = $region48
      $region47: #{tpu_custom_call.1} parent=5 // pred_region
        %s356 = ssub.s32 %s17, 2
        // Predicated region
        $region49: #{tpu_custom_call.1} parent=47 // pred_check
          %p357 = pneg %p114
        $region50: #{tpu_custom_call.1} parent=47 // pred_check_branch
          %359 = sbr.rel (%p357) target = $region52
        $region51: #{tpu_custom_call.1} parent=47 // pred_region
          %s360 = sand.u32 %s99, 1
          %s361 = scalar_lea.sflag [#allocation6], %s360
          %s362 = sand.u32 %s99, 1
          %s363 = smul.addr %s362, 16
          %s364 = scalar_lea.vmem [#allocation9], %s363
          %365 = dma.done %s361, 256
        $region52: #{tpu_custom_call.1} parent=47 // pred_fallthru
          _
      $region48: #{tpu_custom_call.1} parent=5 // pred_fallthru
        _
    $region6: #{tpu_custom_call.1} parent=1 // loop_footer
      %s21 = sadd.s32 1, %s17
    $region7: #{tpu_custom_call.1} parent=1 // loop_footer_branch
      %16 = sbr.rel target = $region3
    $region8: #{tpu_custom_call.1} parent=1 // loop_exit
      _
    %366 = vsyncpa [#allocation5], 1
    %s367 = scalar_lea.sflag [#allocation5], 1
    %368 = vsyncpa %s367, 1
    %369 = vsyncpa [#allocation6], 1
    %s370 = scalar_lea.sflag [#allocation6], 1
    %371 = vsyncpa %s370, 1
    %372 = vsyncpa [#allocation7], 1
    %s373 = scalar_lea.sflag [#allocation7], 1
    %374 = vsyncpa %s373, 1

</llo_original>
